<compile_context>
chip_gen: v6e
topology: v6e:2x2x1
jax: 0.10.0
libtpu: 0.0.40
codegen_flags: <defaults>
</compile_context>

<pallas_src>
from functools import lru_cache, partial

import jax
import jax.numpy as jnp
from jax.experimental import pallas as pl
from jax.experimental.pallas import tpu as pltpu


@lru_cache(maxsize=1)
def _target_tile_bytes():
    """Generation-aware per-tile byte budget.

    Double-buffered in+out must stay inside the default scoped-VMEM limit
    (16 MiB on v5e, 32 MiB on v6e/v7x), so: 4 MiB tiles (~16 MiB total) on
    v6e/v7x, 2 MiB (~8 MiB total) on v5e / unknown chips.
    """
    try:
        kind = jax.devices()[0].device_kind.lower()
    except Exception:
        kind = ""
    if "v6" in kind or "v7" in kind or "tpu7" in kind:
        return 4 * 1024 * 1024
    return 2 * 1024 * 1024


def _squeeze_kernel(blk_min_ref, blk_max_ref, thr_ref, x_ref, o_ref):
    # blk_min_ref / blk_max_ref : SMEM int32[nb]  per-batch-block threshold range
    # thr_ref : VMEM int32[bb, 1]                 per-row threshold = x_len[b] * D
    # x_ref   : VMEM x.dtype[bb, ww_in]
    # o_ref   : VMEM x.dtype[bb, ww_out]          (ww_out <= ww_in)
    b = pl.program_id(0)
    w = pl.program_id(1)
    wout = o_ref.shape[1]
    tile_start = w * wout
    tile_end = tile_start + wout

    mn = blk_min_ref[b]
    mx = blk_max_ref[b]
    full = mn >= tile_end        # every row of this batch block is valid here
    empty = mx <= tile_start     # every row of this batch block is past its length

    @pl.when(full)
    def _():
        o_ref[...] = x_ref[:, :wout]

    @pl.when(empty)
    def _():
        # NOTE: never reads x_ref -> the clamped x index_map may point at a
        # stale (already-resident) block for these tiles; no input DMA issued.
        o_ref[...] = jnp.zeros(o_ref.shape, o_ref.dtype)

    @pl.when(jnp.logical_not(jnp.logical_or(full, empty)))
    def _():
        col = tile_start + jax.lax.broadcasted_iota(jnp.int32, o_ref.shape, 1)
        xv = x_ref[:, :wout]
        o_ref[...] = jnp.where(col < thr_ref[...], xv, jnp.zeros_like(xv))


def _pick_tiles(B, W, Wf, itemsize):
    """Pick (bb, ww_in, ww_out, nw, nb) for the (B, W) mask-copy.

    Block-shape legality: last dim divisible by 128 or equal to the full
    extent; second-to-last a sublane multiple or equal to B.  Holds for both
    the (B, Wf) input and the (B, W) output.
    """
    target = _target_tile_bytes()
    sub = {4: 8, 2: 16, 1: 32}.get(itemsize, 8)
    min_rows = max(1, min(B, sub))
    cap_cols = max(128, target // (min_rows * itemsize) // 128 * 128)

    if W <= cap_cols:
        # Single width tile: full-extent output block (lane-masked only at
        # the very end), input block = 128-aligned cover of the output
        # (never the whole padded row) unless the full row is the only
        # legal choice.
        ww_out = W
        ru = -(-W // 128) * 128
        ww_in = ru if ru <= Wf else Wf
        nw = 1
    else:
        # Lane-dense 128-multiple tiles; only the last tile's store is masked.
        ww_in = ww_out = min(cap_cols, W // 128 * 128)
        nw = pl.cdiv(W, ww_out)

    rows = max(1, target // (ww_in * itemsize))
    if B <= sub:
        bb = B
    else:
        bb = min(B, max(sub, rows // sub * sub))
        if nw > 1:
            # Keep batch blocks modest so blk_max stays a tight per-block
            # bound and the empty-tile input-DMA skip fires on mixed lengths.
            bb = min(bb, 64)
    nb = pl.cdiv(B, bb)

    # v7x has 2 TensorCores/chip: give a "parallel" axis >= 2 steps when the
    # row split is cheap and stays lane-dense (neutral on 1-TC chips).
    if nb * nw == 1 and B >= 2 * sub:
        half = -(-B // 2)
        bb = -(-half // sub) * sub
        nb = pl.cdiv(B, bb)
    return bb, ww_in, ww_out, nw, nb


@partial(jax.jit, static_argnames=("max_len", "block"))
def _squeeze_device(x, x_len, *, max_len, block=None):
    B, T, D = x.shape
    itemsize = jnp.dtype(x.dtype).itemsize
    Wf = T * D                     # full (padded) flattened width
    W = max_len * D                # truncated output width

    x2 = x.reshape(B, Wf)          # contiguous minor-dim merge: free, no copy
    thr = (x_len.astype(jnp.int32) * D).reshape(B, 1)

    if block is None:
        bb, ww_in, ww_out, nw, nb = _pick_tiles(B, W, Wf, itemsize)
    else:
        bb, ww = block             # test override; must satisfy (8,128) rules
        ww_in = ww_out = ww
        nw = pl.cdiv(W, ww)
        nb = pl.cdiv(B, bb)

    # Per-batch-block threshold range, scalar-prefetched into SMEM.
    # Padding rows of the last partial block use:
    #   max <- 0  (cannot enable the copy fast path / inflate the skip bound)
    #   min <- W  (sentinel: cannot disable the straight-copy fast path)
    pad = nb * bb - B
    thr_flat = thr[:, 0]
    blk_max = jnp.max(jnp.pad(thr_flat, (0, pad)).reshape(nb, bb),
                      axis=1).astype(jnp.int32)
    blk_min = jnp.min(jnp.pad(thr_flat, (0, pad), constant_values=W)
                      .reshape(nb, bb), axis=1).astype(jnp.int32)

    if nw > 1:
        def x_index_map(b, w, mn, mx):
            # Fully-padded width tiles are pinned to the last live tile of
            # this batch block: consecutive grid steps then reuse the same
            # block index, so Pallas skips the input DMA entirely; the
            # kernel's "empty" branch never reads x_ref.
            last_live = jnp.maximum(pl.cdiv(mx[b], ww_out) - 1, 0)
            return (b, jnp.minimum(w, last_live))
    else:
        def x_index_map(b, w, mn, mx):
            return (b, 0)

    out2 = pl.pallas_call(
        _squeeze_kernel,
        out_shape=jax.ShapeDtypeStruct((B, W), x.dtype),
        grid_spec=pltpu.PrefetchScalarGridSpec(
            num_scalar_prefetch=2,                       # blk_min, blk_max -> SMEM
            grid=(nb, nw),
            in_specs=[
                pl.BlockSpec((bb, 1), lambda b, w, mn, mx: (b, 0)),   # thr
                pl.BlockSpec((bb, ww_in), x_index_map),               # x
            ],
            out_specs=pl.BlockSpec((bb, ww_out), lambda b, w, mn, mx: (b, w)),
        ),
        compiler_params=pltpu.CompilerParams(
            dimension_semantics=("parallel", "parallel"),
        ),
    )(blk_min, blk_max, thr, x2)

    return out2.reshape(B, max_len, D)


def squeeze_embedding(x, x_len, *, block=None, time_bucket=None):
    """x: (B, T, D) float, x_len: (B,) int lengths.

    Returns (B, max(x_len), D) with positions t >= x_len[b] zeroed, matching
    the pack_padded_sequence -> pad_packed_sequence round-trip.

    time_bucket (opt-in): round the squeezed length up to a multiple of
    `time_bucket` (capped at T).  Extra timesteps are all-zero; avoids one
    recompile per distinct max_len and keeps output tiles lane-dense.
    """
    x_len = x_len.astype(jnp.int32)
    # Output length is data-dependent: one host sync BEFORE launch, so the
    # kernel never touches the padded tail; everything else runs jitted.
    max_len = max(int(jax.device_get(jnp.max(x_len))), 1)
    if time_bucket is not None:
        max_len = min(x.shape[1], -(-max_len // int(time_bucket)) * int(time_bucket))
    return _squeeze_device(x, x_len, max_len=max_len, block=block)


def _reference(x, x_len):
    """Pure-JAX reference of the PyTorch module semantics."""
    B, T, D = x.shape
    max_len = max(int(jax.device_get(jnp.max(x_len))), 1)
    mask = jnp.arange(T)[None, :, None] < x_len[:, None, None]
    return jnp.where(mask, x, 0).astype(x.dtype)[:, :max_len, :]


if __name__ == "__main__":
    key = jax.random.PRNGKey(0)

    # Case 1: small driver shape (B=2, T=8, D=32); truncated width 192 fits
    # one tile -> full-extent output block, 256-wide (lane-aligned) input.
    B, T, D = 2, 8, 32
    x = jax.random.normal(key, (B, T, D), dtype=jnp.float32)
    x_len = jnp.array([6, 3], dtype=jnp.int32)
    out = jax.block_until_ready(squeeze_embedding(x, x_len))
    ref = _reference(x, x_len)
    assert out.shape == ref.shape, (out.shape, ref.shape)
    assert jnp.allclose(out, ref), "case 1 mismatch vs reference"

    # Case 2: tiny truncated width (< 128): input block is now only 128 wide
    # (not the whole padded row).
    x_len2 = jnp.array([2, 1], dtype=jnp.int32)
    out2 = jax.block_until_ready(squeeze_embedding(x, x_len2))
    ref2 = _reference(x, x_len2)
    assert out2.shape == ref2.shape, (out2.shape, ref2.shape)
    assert jnp.allclose(out2, ref2), "case 2 mismatch vs reference"

    # Case 3: forced small blocks -> multi-tile grid (2 x 6) exercising the
    # straight-copy, zero-fill (with clamped-index DMA skip) and masked paths.
    B3, T3, D3 = 16, 32, 32
    x3 = jax.random.normal(jax.random.PRNGKey(0), (B3, T3, D3), dtype=jnp.float32)
    x_len3 = jnp.array([4] * 8 + [24] * 7 + [23], dtype=jnp.int32)
    out3 = jax.block_until_ready(squeeze_embedding(x3, x_len3, block=(8, 128)))
    ref3 = _reference(x3, x_len3)
    assert out3.shape == ref3.shape, (out3.shape, ref3.shape)
    assert jnp.allclose(out3, ref3), "case 3 mismatch vs reference"

    # Case 4: same data with natural tile selection -> single width tile with
    # lane-aligned input cover, batch axis split in two (v7x dual-TC path).
    out4 = jax.block_until_ready(squeeze_embedding(x3, x_len3))
    assert out4.shape == ref3.shape, (out4.shape, ref3.shape)
    assert jnp.allclose(out4, ref3), "case 4 mismatch vs reference"

    # Case 5: B not a sublane multiple + forced blocks -> last batch block is
    # padded; exercises the min-sentinel / max-zero padding and the DMA skip.
    B5, T5, D5 = 10, 24, 32
    x5 = jax.random.normal(jax.random.PRNGKey(0), (B5, T5, D5), dtype=jnp.float32)
    x_len5 = jnp.array([20, 1, 2, 9, 16, 5, 7, 3, 12, 4], dtype=jnp.int32)
    out5 = jax.block_until_ready(squeeze_embedding(x5, x_len5, block=(8, 128)))
    ref5 = _reference(x5, x_len5)
    assert out5.shape == ref5.shape, (out5.shape, ref5.shape)
    assert jnp.allclose(out5, ref5), "case 5 mismatch vs reference"

    # Case 6: opt-in time bucketing (padded tail must be all zeros).
    out6 = jax.block_until_ready(squeeze_embedding(x5, x_len5, time_bucket=8))
    assert out6.shape == (B5, 24, D5), out6.shape
    assert jnp.allclose(out6[:, :ref5.shape[1], :], ref5), "case 6 head mismatch"
    assert jnp.allclose(out6[:, ref5.shape[1]:, :], 0.0), "case 6 tail not zero"

    print("KERNEL_OK")
</pallas_src>

<mosaic_0001>
module attributes {stable_mosaic.version = 11 : i64} {
  func.func @_squeeze_kernel(%arg0: i32, %arg1: i32, %arg2: memref<1xi32, #tpu.memory_space<smem>>, %arg3: memref<1xi32, #tpu.memory_space<smem>>, %arg4: memref<2x1xi32, #tpu.memory_space<vmem>>, %arg5: memref<2x256xf32, #tpu.memory_space<vmem>>, %arg6: memref<2x192xf32, #tpu.memory_space<vmem>>) attributes {dimension_semantics = [#tpu.dimension_semantics<parallel>, #tpu.dimension_semantics<parallel>], iteration_bounds = array<i64: 1, 1>, scalar_prefetch = 2 : i64, scratch_operands = 0 : i64, tpu.core_type = #tpu.core_type<tc>, window_params = [{transform_indices = @transform_0, window_bounds = array<i64: 2, 1>}, {transform_indices = @transform_1, window_bounds = array<i64: 2, 256>}, {transform_indices = @transform_2, window_bounds = array<i64: 2, 192>}]} {
    %c192_i32 = arith.constant 192 : i32
    %0 = arith.muli %arg1, %c192_i32 : i32
    %c192_i32_0 = arith.constant 192 : i32
    %1 = arith.addi %0, %c192_i32_0 : i32
    %2 = arith.index_cast %arg0 : i32 to index
    %3 = memref.load %arg2[%2] : memref<1xi32, #tpu.memory_space<smem>>
    %4 = arith.index_cast %arg0 : i32 to index
    %5 = memref.load %arg3[%4] : memref<1xi32, #tpu.memory_space<smem>>
    %6 = arith.cmpi sge, %3, %1 : i32
    %7 = arith.cmpi sle, %5, %0 : i32
    %8 = arith.extui %6 : i1 to i32
    %c0_i32 = arith.constant 0 : i32
    %9 = arith.cmpi ne, %8, %c0_i32 : i32
    scf.if %9 {
      %c0 = arith.constant 0 : index
      %c0_3 = arith.constant 0 : index
      %16 = vector.load %arg5[%c0, %c0_3] : memref<2x256xf32, #tpu.memory_space<vmem>>, vector<2x192xf32>
      %c0_4 = arith.constant 0 : index
      %c0_5 = arith.constant 0 : index
      %17 = vector.load %arg6[%c0_4, %c0_5] : memref<2x192xf32, #tpu.memory_space<vmem>>, vector<2x192xf32>
      tpu.vector_store %arg6[%c0_4, %c0_5], %16 {strides = array<i32>} : memref<2x192xf32, #tpu.memory_space<vmem>>, vector<2x192xf32>,
    } else {
    }
    %10 = arith.extui %7 : i1 to i32
    %c0_i32_1 = arith.constant 0 : i32
    %11 = arith.cmpi ne, %10, %c0_i32_1 : i32
    scf.if %11 {
      %cst = arith.constant 0.000000e+00 : f32
      %16 = vector.broadcast %cst : f32 to vector<2x192xf32>
      %c0 = arith.constant 0 : index
      %c0_3 = arith.constant 0 : index
      %17 = vector.load %arg6[%c0, %c0_3] : memref<2x192xf32, #tpu.memory_space<vmem>>, vector<2x192xf32>
      tpu.vector_store %arg6[%c0, %c0_3], %16 {strides = array<i32>} : memref<2x192xf32, #tpu.memory_space<vmem>>, vector<2x192xf32>,
    } else {
    }
    %12 = arith.ori %6, %7 : i1
    %true = arith.constant true
    %13 = arith.xori %12, %true : i1
    %14 = arith.extui %13 : i1 to i32
    %c0_i32_2 = arith.constant 0 : i32
    %15 = arith.cmpi ne, %14, %c0_i32_2 : i32
    scf.if %15 {
      %16 = tpu.iota {dimensions = array<i32: 1>} : vector<2x192xi32>
      %17 = vector.broadcast %0 : i32 to vector<2x192xi32>
      %18 = arith.addi %17, %16 : vector<2x192xi32>
      %c0 = arith.constant 0 : index
      %c0_3 = arith.constant 0 : index
      %19 = vector.load %arg5[%c0, %c0_3] : memref<2x256xf32, #tpu.memory_space<vmem>>, vector<2x192xf32>
      %c0_4 = arith.constant 0 : index
      %c0_5 = arith.constant 0 : index
      %20 = vector.load %arg4[%c0_4, %c0_5] : memref<2x1xi32, #tpu.memory_space<vmem>>, vector<2x1xi32>
      %21 = vector.broadcast %20 : vector<2x1xi32> to vector<2x192xi32>
      %22 = arith.cmpi slt, %18, %21 : vector<2x192xi32>
      %cst = arith.constant 0.000000e+00 : f32
      %23 = vector.broadcast %cst : f32 to vector<2x192xf32>
      %24 = arith.select %22, %19, %23 : vector<2x192xi1>, vector<2x192xf32>
      %c0_6 = arith.constant 0 : index
      %c0_7 = arith.constant 0 : index
      %25 = vector.load %arg6[%c0_6, %c0_7] : memref<2x192xf32, #tpu.memory_space<vmem>>, vector<2x192xf32>
      tpu.vector_store %arg6[%c0_6, %c0_7], %24 {strides = array<i32>} : memref<2x192xf32, #tpu.memory_space<vmem>>, vector<2x192xf32>,
    } else {
    }
    return
  }
  func.func @transform_0(%arg0: i32, %arg1: i32, %arg2: memref<1xi32, #tpu.memory_space<smem>>, %arg3: memref<1xi32, #tpu.memory_space<smem>>) -> (i32, i32) {
    %c0_i32 = arith.constant 0 : i32
    %c0_i32_0 = arith.constant 0 : i32
    return %arg0, %c0_i32 : i32, i32
  }
  func.func @transform_1(%arg0: i32, %arg1: i32, %arg2: memref<1xi32, #tpu.memory_space<smem>>, %arg3: memref<1xi32, #tpu.memory_space<smem>>) -> (i32, i32) {
    %c0_i32 = arith.constant 0 : i32
    %c0_i32_0 = arith.constant 0 : i32
    return %arg0, %c0_i32 : i32, i32
  }
  func.func @transform_2(%arg0: i32, %arg1: i32, %arg2: memref<1xi32, #tpu.memory_space<smem>>, %arg3: memref<1xi32, #tpu.memory_space<smem>>) -> (i32, i32) {
    %c0_i32 = arith.constant 0 : i32
    return %arg0, %arg1 : i32, i32
  }
}

</mosaic_0001>

<llo_original>
// kernel: _squeeze_device.1
$region0: #{_squeeze_device.1}
  #allocation0 [shape = 'u32[]', space=smem, size = 0x4, offset = 0x4, fixed_abs, tag = 'smem constant byte address 0x4 - core index']
  #allocation1 [shape = 'u32[144,128]{1,0:T(1,128)}', space=vmem, size = 0x12000, scoped, tag = 'internal scratch']
  #allocation2 [shape = 's32[1]{0}', space=sflag, size = 0x4, scoped, tag = 'scoped memory for _squeeze_device.1']
  #allocation3 [shape = 's32[1]{0:T(128)S(6)}', space=smem, size = 0x200, scoped, tag = 'prefetched SMEM operand 0']
  #allocation4 [shape = 's32[1]{0:T(128)S(6)}', space=smem, size = 0x200, scoped, tag = 'prefetched SMEM operand 1']
  %s0 = inlined_call_operand.<no memory space> [shape: s32[1], index: 0, kind: input, shape index: {}]
  %s1 = inlined_call_operand.<no memory space> [shape: s32[1], index: 1, kind: input, shape index: {}]
  %s2 = inlined_call_operand.vmem [shape: s32[2,1], index: 2, kind: input, shape index: {}]
  %s3 = inlined_call_operand.vmem [shape: f32[2,256], index: 3, kind: input, shape index: {}]
  %s4 = inlined_call_operand.vmem [shape: f32[2,192], index: 4, kind: output, shape index: {}]
  %s5 = sld [smem:[#allocation0]]
  $region30: #{_squeeze_device.1} parent=0
    _
  %s7 = ssub.s32 1, %s5
  %s8 = scalar_select 0, %s7, %s5
  %9 = sst [smem:[#allocation3]] %s0
  %10 = sst [smem:[#allocation4]] %s1
  // Predicated region
  $region2: #{_squeeze_device.1} parent=0 // pred_check
    _
  $region3: #{_squeeze_device.1} parent=0 // pred_check_branch
    %12 = sbr.rel (0) target = $region5
  $region4: #{_squeeze_device.1} parent=0 // pred_region
    _
  $region5: #{_squeeze_device.1} parent=0 // pred_fallthru
    _
  // Predicated region
  $region6: #{_squeeze_device.1} parent=0 // pred_check
    _
  $region7: #{_squeeze_device.1} parent=0 // pred_check_branch
    %14 = sbr.rel (0) target = $region9
  $region8: #{_squeeze_device.1} parent=0 // pred_region
    _
  $region9: #{_squeeze_device.1} parent=0 // pred_fallthru
    _
  %s15 = smul.u32 0, 192
  %s16 = sadd.s32 %s15, 192
  %s17 = sld [smem:[#allocation3]]
  %s18 = sld [smem:[#allocation4]]
  %p19 = scmp.ge.s32.totalorder %s17, %s16
  %p20 = scmp.le.s32.totalorder %s18, %s15
  // Predicated region
  $region10: #{_squeeze_device.1} parent=0 // pred_check
    %p21 = pneg %p19
  $region11: #{_squeeze_device.1} parent=0 // pred_check_branch
    %23 = sbr.rel (%p21) target = $region13
  $region12: #{_squeeze_device.1} parent=0 // pred_region
    %v24 = vld [vmem:[%s3] sm:$0xf]
    %vm25 = vcmask 1041408
    %vm26 = vcmask 519170
    %vm27 = vmor %vm26, %vm25
    %28 = vst.msk [vmem:[%s4] sm:$0xf] %vm27, %v24
  $region13: #{_squeeze_device.1} parent=0 // pred_fallthru
    _
  // Predicated region
  $region14: #{_squeeze_device.1} parent=0 // pred_check
    %p29 = pneg %p20
  $region15: #{_squeeze_device.1} parent=0 // pred_check_branch
    %31 = sbr.rel (%p29) target = $region17
  $region16: #{_squeeze_device.1} parent=0 // pred_region
    %vm32 = vcmask 1041408
    %vm33 = vcmask 519170
    %vm34 = vmor %vm33, %vm32
    %35 = vst.msk [vmem:[%s4] sm:$0xf] %vm34, 0.0
  $region17: #{_squeeze_device.1} parent=0 // pred_fallthru
    _
  %p36 = por %p19, %p20
  %p37 = pneg %p36
  // Predicated region
  $region18: #{_squeeze_device.1} parent=0 // pred_check
    _
  $region19: #{_squeeze_device.1} parent=0 // pred_check_branch
    %39 = sbr.rel (%p36) target = $region21
  $region20: #{_squeeze_device.1} parent=0 // pred_region
    %v40 = vlaneseq
    %v41 = vand.u32 %v40, 127
    %v42 = vadd.s32 %v41, 128
    %v43 = vstv %s15
    %v44 = vadd.s32 %v43, %v41
    %v45 = vadd.s32 %v43, %v42
    %v46 = vld [vmem:[%s3] sm:$0xf]
    %v47 = vld [vmem:[%s2] sm:$0x3]
    %48 = vset.pattern.permute.xlu0 0
    %49 = vperm.xlu0 %48, %v47
    %v50 = vpop.permute.xlu0 %49
    %vm51 = vcmp.lt.s32.totalorder %v44, %v50
    %vm52 = vcmp.lt.s32.totalorder %v45, %v50
    %v55 = vunpack.c.l.s4 1983009808
    %v56 = vunpack.c.0.s8 %v55
    %v57 = vlaneseq
    %v58 = vshrl.u32 %v57, 7
    %v59 = vsub.s32 %v56, %v58
    %v60 = vrot.slane %v46, %v59
    %v61 = vcombine.high %v60, %v60
    %v64 = vsel %vm51, %v60, 0.0
    %v65 = vsel %vm52, %v61, 0.0
    %v68 = vcombine.low %v64, %v65
    %v70 = vunpack.c.l.s4 1983009808
    %v71 = vunpack.c.0.s8 %v70
    %v72 = vlaneseq
    %v73 = vshrl.u32 %v72, 7
    %v74 = vsub.s32 %v71, %v73
    %v75 = vrot.slane %v68, %v74
    %vm77 = vcmask 1041408
    %vm78 = vcmask 519170
    %vm79 = vmor %vm78, %vm77
    %80 = vst.msk [vmem:[%s4] sm:$0xf] %vm79, %v75
  $region21: #{_squeeze_device.1} parent=0 // pred_fallthru
    _
  // Predicated region
  $region22: #{_squeeze_device.1} parent=0 // pred_check
    _
  $region23: #{_squeeze_device.1} parent=0 // pred_check_branch
    %82 = sbr.rel (0) target = $region25
  $region24: #{_squeeze_device.1} parent=0 // pred_region
    _
  $region25: #{_squeeze_device.1} parent=0 // pred_fallthru
    _
  // Predicated region
  $region26: #{_squeeze_device.1} parent=0 // pred_check
    _
  $region27: #{_squeeze_device.1} parent=0 // pred_check_branch
    %84 = sbr.rel (0) target = $region29
  $region28: #{_squeeze_device.1} parent=0 // pred_region
    _
  $region29: #{_squeeze_device.1} parent=0 // pred_fallthru
    _

</llo_original>
